<compile_context>
chip_gen: v7x
topology: tpu7x:2x2x1
jax: 0.10.0
libtpu: 0.0.40
codegen_flags: <defaults>
</compile_context>

<pallas_src>
import functools

import jax
import jax.numpy as jnp
from jax.experimental import pallas as pl
from jax.experimental.pallas import tpu as pltpu

_SQRT_HALF = 0.7071067811865476


def _round_up(x, m):
    return (x + m - 1) // m * m


def _tile_divisors(total_pad):
    """Multiples of 128 that evenly divide `total_pad`, in descending order."""
    n128 = total_pad // 128
    return [d * 128 for d in range(n128, 0, -1) if n128 % d == 0]


def _vmem_capacity_bytes():
    """Per-TensorCore VMEM capacity, with safe fallbacks."""
    try:
        cap = int(pltpu.get_tpu_info().vmem_capacity_bytes)
        if cap > 0:
            return cap
    except Exception:
        pass
    try:
        kind = jax.devices()[0].device_kind.lower()
        if "v7" in kind or "7x" in kind:
            return 64 * 1024 * 1024
    except Exception:
        pass
    return 128 * 1024 * 1024  # v5e / v6e


# ---------------------------------------------------------------------------
# Kernels
# ---------------------------------------------------------------------------
def _fc1_gelu(x_ref, w1_ref, b1_ref):
    """fc1 chunk + bias + exact-erf GELU (matches torch.nn.GELU default)."""
    h = jnp.dot(x_ref[...], w1_ref[...], preferred_element_type=jnp.float32)
    h = h + b1_ref[...].astype(jnp.float32)
    # Exact GELU in f32.  (If numerics allowed, tanh-GELU would move this work
    # from the VALU to the otherwise-idle EUP slot.)
    h = 0.5 * h * (1.0 + jax.lax.erf(h * jnp.float32(_SQRT_HALF)))
    # Dropout with p = 0.0 is the identity.
    # TODO(synk): for p > 0, draw a keep-mask via pltpu.prng_seed /
    #             pltpu.prng_random_bits and scale by 1/(1-p).
    return h


def _mlp_kernel_acc(x_ref, w1_ref, b1_ref, w2_ref, b2_ref, o_ref, acc_ref):
    """Variant with a dedicated f32 accumulator (non-f32 output dtypes)."""
    k = pl.program_id(2)

    @pl.when(k == 0)
    def _():
        acc_ref[...] = jnp.zeros_like(acc_ref)

    h = _fc1_gelu(x_ref, w1_ref, b1_ref)
    acc_ref[...] += jnp.dot(h.astype(w2_ref.dtype), w2_ref[...],
                            preferred_element_type=jnp.float32)

    @pl.when(k == pl.num_programs(2) - 1)
    def _():
        y = acc_ref[...] + b2_ref[...].astype(jnp.float32)
        o_ref[...] = y.astype(o_ref.dtype)


def _mlp_kernel_f32_out(x_ref, w1_ref, b1_ref, w2_ref, b2_ref, o_ref):
    """f32 output: accumulate directly into the resident output tile
    (drops the tm*tn*4 B scratch -- meaningful VMEM headroom on v7x)."""
    k = pl.program_id(2)

    @pl.when(k == 0)
    def _():
        o_ref[...] = jnp.zeros_like(o_ref)

    h = _fc1_gelu(x_ref, w1_ref, b1_ref)
    o_ref[...] += jnp.dot(h.astype(w2_ref.dtype), w2_ref[...],
                          preferred_element_type=jnp.float32)

    @pl.when(k == pl.num_programs(2) - 1)
    def _():
        o_ref[...] += b2_ref[...].astype(jnp.float32)


# ---------------------------------------------------------------------------
# Tile / VMEM configuration
# ---------------------------------------------------------------------------
def _choose_config(m, in_pad, hid_pad, out_pad, x_isz, w_isz, out_isz,
                   use_acc, block_m, block_hid, block_n):
    cap = _vmem_capacity_bytes()
    big_vmem = cap >= 100 * 2**20          # v5e / v6e: 128 MiB per TC
    # Never request the full physical VMEM -- leave headroom for Mosaic's
    # internal scratch and the pipeline's own buffers (v7x: ~48 MiB of 64).
    vmem_limit = int(min(cap - 16 * 2**20, cap * 0.82))

    # Sub-32-bit dtypes pack two/four rows per sublane: row tiles must be
    # 16-aligned for bf16 (32 for int8) to avoid masked partial tiles.
    sub = max(8, 32 // x_isz)

    if block_m is None:
        block_m = 512 if big_vmem else 256     # bigger tm = less weight re-stream
    if block_hid is None:
        block_hid = 1024 if big_vmem else 256
    if block_n is None:
        # Only tile the OUT dim when the full-width out/acc/w2 tiles are what
        # would cap tm (mainly a v7x / very-wide-output concern): splitting it
        # recomputes the fc1+GELU chunk per OUT tile.
        block_n = out_pad if out_pad <= (8192 if big_vmem else 2048) else 1024

    block_m = _round_up(block_m, sub)
    tm = min(block_m, _round_up(m, sub))

    # Tiles that exactly divide the 128-aligned sizes -> no zero-work columns.
    hid_cands = [t for t in _tile_divisors(hid_pad) if t <= block_hid] or [128]
    out_cands = [t for t in _tile_divisors(out_pad) if t <= block_n] or [128]
    hi = oi = 0
    t_hid = hid_cands[hi]
    tn = out_cands[oi]

    def vmem_need(tm_, th_, tn_):
        b = (2 * tm_ * in_pad * x_isz        # x tile (double-buffered)
             + 2 * in_pad * th_ * w_isz      # w1 tile
             + 2 * th_ * tn_ * w_isz         # w2 tile
             + 2 * (th_ + tn_) * w_isz       # bias tiles
             + 2 * tm_ * tn_ * out_isz)      # resident output tile
        if use_acc:
            b += tm_ * tn_ * 4               # f32 accumulator scratch
        return b

    budget = int(vmem_limit * 0.9)
    while vmem_need(tm, t_hid, tn) > budget:
        if hi + 1 < len(hid_cands):          # shrink hidden chunk first
            hi += 1
            t_hid = hid_cands[hi]
        elif oi + 1 < len(out_cands):        # then the output tile
            oi += 1
            tn = out_cands[oi]
        elif tm > sub:                       # last resort: shrink the row tile
            tm = max(sub, _round_up(tm // 2, sub))
        else:
            break
    # TODO(synk): extremely large in_features would also need an IN-dim
    #             reduction axis for fc1; not needed for typical MLP sizes.
    return tm, t_hid, tn, vmem_limit


# ---------------------------------------------------------------------------
# pallas_call wrapper
# ---------------------------------------------------------------------------
@functools.partial(
    jax.jit, static_argnames=("tm", "t_hid", "tn", "vmem_limit", "use_acc"))
def _mlp_pallas_call(x2d, w1, b1, w2, b2, *, tm, t_hid, tn, vmem_limit,
                     use_acc):
    m, in_features = x2d.shape
    hidden_features = w1.shape[1]
    out_features = w2.shape[1]

    in_pad = _round_up(in_features, 128)
    hid_pad = _round_up(hidden_features, 128)
    out_pad = _round_up(out_features, 128)
    m_pad = _round_up(m, tm)
    out_dtype = x2d.dtype

    def pad2(a, rows, cols):
        if rows or cols:                      # skip the HBM copy when aligned
            return jnp.pad(a, ((0, rows), (0, cols)))
        return a

    x_p = pad2(x2d, m_pad - m, in_pad - in_features)
    w1_p = pad2(w1, in_pad - in_features, hid_pad - hidden_features)
    b1_p = pad2(b1.reshape(1, -1), 0, hid_pad - hidden_features)
    w2_p = pad2(w2, hid_pad - hidden_features, out_pad - out_features)
    b2_p = pad2(b2.reshape(1, -1), 0, out_pad - out_features)

    m_tiles = m_pad // tm
    n_tiles = out_pad // tn
    k_tiles = hid_pad // t_hid

    x_isz = jnp.dtype(x2d.dtype).itemsize
    w_isz = jnp.dtype(w1.dtype).itemsize
    o_isz = jnp.dtype(out_dtype).itemsize
    # Real HBM traffic: w1 (+b1) is re-streamed once per (row tile, out tile),
    # w2 (+b2) once per row tile, x once per out tile.
    bytes_accessed = int(
        m_pad * in_pad * x_isz * n_tiles
        + (in_pad + 1) * hid_pad * w_isz * m_tiles * n_tiles
        + (hid_pad + 1) * out_pad * w_isz * m_tiles
        + m_pad * out_pad * o_isz)
    cost = pl.CostEstimate(
        flops=int(2 * m_pad * in_pad * hid_pad * n_tiles
                  + 2 * m_pad * hid_pad * out_pad),
        transcendentals=int(m_pad * hid_pad * n_tiles),
        bytes_accessed=bytes_accessed)

    kernel = _mlp_kernel_acc if use_acc else _mlp_kernel_f32_out
    scratch = [pltpu.VMEM((tm, tn), jnp.float32)] if use_acc else []

    out = pl.pallas_call(
        kernel,
        out_shape=jax.ShapeDtypeStruct((m_pad, out_pad), out_dtype),
        grid_spec=pltpu.PrefetchScalarGridSpec(
            num_scalar_prefetch=0,
            grid=(m_tiles, n_tiles, k_tiles),
            in_specs=[
                pl.BlockSpec((tm, in_pad), lambda i, n, k: (i, 0)),
                pl.BlockSpec((in_pad, t_hid), lambda i, n, k: (0, k)),
                pl.BlockSpec((1, t_hid), lambda i, n, k: (0, k)),
                pl.BlockSpec((t_hid, tn), lambda i, n, k: (k, n)),
                pl.BlockSpec((1, tn), lambda i, n, k: (0, n)),
            ],
            out_specs=pl.BlockSpec((tm, tn), lambda i, n, k: (i, n)),
            scratch_shapes=scratch,
        ),
        compiler_params=pltpu.CompilerParams(
            dimension_semantics=("parallel", "parallel", "arbitrary"),
            vmem_limit_bytes=int(vmem_limit)),
        cost_estimate=cost,
    )(x_p, w1_p, b1_p, w2_p, b2_p)

    if m_pad != m or out_pad != out_features:
        out = out[:m, :out_features]
    return out


def mlp_pallas(x, w1, b1, w2, b2, *, block_m=None, block_hid=None,
               block_n=None):
    """x: (..., in_features) -> (..., out_features).

    Weights are stored (in_features, out_features) -- the transpose of
    nn.Linear.weight -- so the kernel computes x @ W + b.  Dropout with
    p = 0.0 (the module default / eval mode) is the identity.
    """
    in_features = x.shape[-1]
    hidden_features = w1.shape[1]
    out_features = w2.shape[1]
    lead_shape = x.shape[:-1]

    x2d = x.reshape(-1, in_features)
    m = x2d.shape[0]

    in_pad = _round_up(in_features, 128)
    hid_pad = _round_up(hidden_features, 128)
    out_pad = _round_up(out_features, 128)

    # f32 output -> accumulate straight into the output tile (no scratch).
    use_acc = bool(x.dtype != jnp.float32)

    tm, t_hid, tn, vmem_limit = _choose_config(
        m, in_pad, hid_pad, out_pad,
        jnp.dtype(x.dtype).itemsize, jnp.dtype(w1.dtype).itemsize,
        jnp.dtype(x.dtype).itemsize, use_acc, block_m, block_hid, block_n)

    out = _mlp_pallas_call(x2d, w1, b1, w2, b2, tm=tm, t_hid=t_hid, tn=tn,
                           vmem_limit=vmem_limit, use_acc=use_acc)
    return out.reshape(*lead_shape, out_features)


def _init_linear(key, fan_in, fan_out, dtype=jnp.float32):
    """nn.Linear-style init (uniform +/- 1/sqrt(fan_in)).
    Returns W with shape (fan_in, fan_out) (transposed vs. PyTorch) + bias."""
    kw, kb = jax.random.split(key)
    bound = 1.0 / jnp.sqrt(fan_in)
    w = jax.random.uniform(kw, (fan_in, fan_out), dtype, -bound, bound)
    b = jax.random.uniform(kb, (fan_out,), dtype, -bound, bound)
    return w, b


if __name__ == "__main__":
    in_features, hidden_features, out_features = 32, 64, 16
    batch, seq = 2, 8

    key = jax.random.PRNGKey(0)
    kx, k1, k2 = jax.random.split(key, 3)

    x = jax.random.normal(kx, (batch, seq, in_features), jnp.float32)
    w1, b1 = _init_linear(k1, in_features, hidden_features)
    w2, b2 = _init_linear(k2, hidden_features, out_features)

    # f32 path (direct accumulation into the output tile).
    y = jax.block_until_ready(mlp_pallas(x, w1, b1, w2, b2))

    # Pure-JAX reference (exact-erf GELU, dropout p=0 is identity).
    h_ref = jax.nn.gelu(x @ w1 + b1, approximate=False)
    y_ref = h_ref @ w2 + b2
    assert y.shape == (batch, seq, out_features)
    assert jnp.allclose(y, y_ref, atol=2e-5, rtol=2e-5)

    # bf16 path (exercises the f32-accumulator-scratch kernel variant and the
    # 16-row sublane alignment for packed dtypes).
    y_bf = jax.block_until_ready(
        mlp_pallas(x.astype(jnp.bfloat16), w1.astype(jnp.bfloat16),
                   b1.astype(jnp.bfloat16), w2.astype(jnp.bfloat16),
                   b2.astype(jnp.bfloat16)))
    assert y_bf.shape == (batch, seq, out_features)
    assert bool(jnp.all(jnp.isfinite(y_bf.astype(jnp.float32))))
    assert jnp.allclose(y_bf.astype(jnp.float32), y_ref, atol=0.25, rtol=0.25)

    print("KERNEL_OK")
</pallas_src>

<mosaic_0001>
module attributes {stable_mosaic.version = 11 : i64} {
  func.func @_mlp_kernel_f32_out(%arg0: i32, %arg1: i32, %arg2: i32, %arg3: memref<16x128xf32, #tpu.memory_space<vmem>>, %arg4: memref<128x128xf32, #tpu.memory_space<vmem>>, %arg5: memref<1x128xf32, #tpu.memory_space<vmem>>, %arg6: memref<128x128xf32, #tpu.memory_space<vmem>>, %arg7: memref<1x128xf32, #tpu.memory_space<vmem>>, %arg8: memref<16x128xf32, #tpu.memory_space<vmem>>) attributes {dimension_semantics = [#tpu.dimension_semantics<parallel>, #tpu.dimension_semantics<parallel>, #tpu.dimension_semantics<arbitrary>], iteration_bounds = array<i64: 1, 1, 1>, scalar_prefetch = 0 : i64, scratch_operands = 0 : i64, tpu.core_type = #tpu.core_type<tc>, window_params = [{transform_indices = @transform_0, window_bounds = array<i64: 16, 128>}, {transform_indices = @transform_1, window_bounds = array<i64: 128, 128>}, {transform_indices = @transform_2, window_bounds = array<i64: 1, 128>}, {transform_indices = @transform_3, window_bounds = array<i64: 128, 128>}, {transform_indices = @transform_4, window_bounds = array<i64: 1, 128>}, {transform_indices = @transform_5, window_bounds = array<i64: 16, 128>}]} {
    %c0_i32 = arith.constant 0 : i32
    %0 = arith.cmpi eq, %arg2, %c0_i32 : i32
    %1 = arith.extui %0 : i1 to i32
    %c0_i32_0 = arith.constant 0 : i32
    %2 = arith.cmpi ne, %1, %c0_i32_0 : i32
    scf.if %2 {
      %cst_18 = arith.constant 0.000000e+00 : f32
      %25 = vector.broadcast %cst_18 : f32 to vector<16x128xf32>
      %c0_19 = arith.constant 0 : index
      %c0_20 = arith.constant 0 : index
      %26 = vector.load %arg8[%c0_19, %c0_20] : memref<16x128xf32, #tpu.memory_space<vmem>>, vector<16x128xf32>
      tpu.vector_store %arg8[%c0_19, %c0_20], %25 {strides = array<i32>} : memref<16x128xf32, #tpu.memory_space<vmem>>, vector<16x128xf32>,
    } else {
    }
    %c0 = arith.constant 0 : index
    %c0_1 = arith.constant 0 : index
    %3 = vector.load %arg3[%c0, %c0_1] : memref<16x128xf32, #tpu.memory_space<vmem>>, vector<16x128xf32>
    %c0_2 = arith.constant 0 : index
    %c0_3 = arith.constant 0 : index
    %4 = vector.load %arg4[%c0_2, %c0_3] : memref<128x128xf32, #tpu.memory_space<vmem>>, vector<128x128xf32>
    %cst = arith.constant dense<0.000000e+00> : vector<16x128xf32>
    %5 = tpu.matmul %3, %4, %cst {dimension_numbers = #tpu.dot_dimension_numbers<[1], [0], [0], [1], [0, 0, 1, 1], [], []>} : vector<16x128xf32>, vector<128x128xf32>, vector<16x128xf32> -> vector<16x128xf32>
    %c0_4 = arith.constant 0 : index
    %c0_5 = arith.constant 0 : index
    %6 = vector.load %arg5[%c0_4, %c0_5] : memref<1x128xf32, #tpu.memory_space<vmem>>, vector<1x128xf32>
    %7 = vector.broadcast %6 : vector<1x128xf32> to vector<16x128xf32>
    %8 = arith.addf %5, %7 : vector<16x128xf32>
    %cst_6 = arith.constant 5.000000e-01 : f32
    %9 = vector.broadcast %cst_6 : f32 to vector<16x128xf32>
    %10 = arith.mulf %9, %8 : vector<16x128xf32>
    %cst_7 = arith.constant 0.707106769 : f32
    %11 = vector.broadcast %cst_7 : f32 to vector<16x128xf32>
    %12 = arith.mulf %8, %11 : vector<16x128xf32>
    %13 = math.erf %12 : vector<16x128xf32>
    %cst_8 = arith.constant 1.000000e+00 : f32
    %14 = vector.broadcast %cst_8 : f32 to vector<16x128xf32>
    %15 = arith.addf %14, %13 : vector<16x128xf32>
    %16 = arith.mulf %10, %15 : vector<16x128xf32>
    %c0_9 = arith.constant 0 : index
    %c0_10 = arith.constant 0 : index
    %17 = vector.load %arg8[%c0_9, %c0_10] : memref<16x128xf32, #tpu.memory_space<vmem>>, vector<16x128xf32>
    %c0_11 = arith.constant 0 : index
    %c0_12 = arith.constant 0 : index
    %18 = vector.load %arg6[%c0_11, %c0_12] : memref<128x128xf32, #tpu.memory_space<vmem>>, vector<128x128xf32>
    %cst_13 = arith.constant dense<0.000000e+00> : vector<16x128xf32>
    %19 = tpu.matmul %16, %18, %cst_13 {dimension_numbers = #tpu.dot_dimension_numbers<[1], [0], [0], [1], [0, 0, 1, 1], [], []>} : vector<16x128xf32>, vector<128x128xf32>, vector<16x128xf32> -> vector<16x128xf32>
    %20 = arith.addf %17, %19 : vector<16x128xf32>
    %c0_14 = arith.constant 0 : index
    %c0_15 = arith.constant 0 : index
    %21 = vector.load %arg8[%c0_14, %c0_15] : memref<16x128xf32, #tpu.memory_space<vmem>>, vector<16x128xf32>
    tpu.vector_store %arg8[%c0_14, %c0_15], %20 {strides = array<i32>} : memref<16x128xf32, #tpu.memory_space<vmem>>, vector<16x128xf32>,
    %c0_i32_16 = arith.constant 0 : i32
    %22 = arith.cmpi eq, %arg2, %c0_i32_16 : i32
    %23 = arith.extui %22 : i1 to i32
    %c0_i32_17 = arith.constant 0 : i32
    %24 = arith.cmpi ne, %23, %c0_i32_17 : i32
    scf.if %24 {
      %c0_18 = arith.constant 0 : index
      %c0_19 = arith.constant 0 : index
      %25 = vector.load %arg8[%c0_18, %c0_19] : memref<16x128xf32, #tpu.memory_space<vmem>>, vector<16x128xf32>
      %c0_20 = arith.constant 0 : index
      %c0_21 = arith.constant 0 : index
      %26 = vector.load %arg7[%c0_20, %c0_21] : memref<1x128xf32, #tpu.memory_space<vmem>>, vector<1x128xf32>
      %27 = vector.broadcast %26 : vector<1x128xf32> to vector<16x128xf32>
      %28 = arith.addf %25, %27 : vector<16x128xf32>
      %c0_22 = arith.constant 0 : index
      %c0_23 = arith.constant 0 : index
      %29 = vector.load %arg8[%c0_22, %c0_23] : memref<16x128xf32, #tpu.memory_space<vmem>>, vector<16x128xf32>
      tpu.vector_store %arg8[%c0_22, %c0_23], %28 {strides = array<i32>} : memref<16x128xf32, #tpu.memory_space<vmem>>, vector<16x128xf32>,
    } else {
    }
    return
  }
  func.func @transform_0(%arg0: i32, %arg1: i32, %arg2: i32) -> (i32, i32) {
    %c0_i32 = arith.constant 0 : i32
    %c0_i32_0 = arith.constant 0 : i32
    return %arg0, %c0_i32 : i32, i32
  }
  func.func @transform_1(%arg0: i32, %arg1: i32, %arg2: i32) -> (i32, i32) {
    %c0_i32 = arith.constant 0 : i32
    %c0_i32_0 = arith.constant 0 : i32
    return %c0_i32, %arg2 : i32, i32
  }
  func.func @transform_2(%arg0: i32, %arg1: i32, %arg2: i32) -> (i32, i32) {
    %c0_i32 = arith.constant 0 : i32
    %c0_i32_0 = arith.constant 0 : i32
    return %c0_i32, %arg2 : i32, i32
  }
  func.func @transform_3(%arg0: i32, %arg1: i32, %arg2: i32) -> (i32, i32) {
    %c0_i32 = arith.constant 0 : i32
    return %arg2, %arg1 : i32, i32
  }
  func.func @transform_4(%arg0: i32, %arg1: i32, %arg2: i32) -> (i32, i32) {
    %c0_i32 = arith.constant 0 : i32
    %c0_i32_0 = arith.constant 0 : i32
    return %c0_i32, %arg1 : i32, i32
  }
  func.func @transform_5(%arg0: i32, %arg1: i32, %arg2: i32) -> (i32, i32) {
    %c0_i32 = arith.constant 0 : i32
    return %arg0, %arg1 : i32, i32
  }
}

</mosaic_0001>

<llo_original>
// kernel: _mlp_pallas_call.1
$region0: #{_mlp_pallas_call.1}
  #allocation0 [shape = 'u32[]', space=smem, size = 0x4, offset = 0x4, fixed_abs, tag = 'smem constant byte address 0x4 - core index']
  #allocation1 [shape = 'u32[144,128]{1,0:T(1,128)}', space=vmem, size = 0x12000, scoped, tag = 'internal scratch']
  %s0 = inlined_call_operand.hbm [shape: f32[16,128], index: 0, kind: input, shape index: {}]
  %s1 = inlined_call_operand.hbm [shape: f32[128,128], index: 1, kind: input, shape index: {}]
  %s2 = inlined_call_operand.hbm [shape: f32[1,128], index: 2, kind: input, shape index: {}]
  %s3 = inlined_call_operand.hbm [shape: f32[128,128], index: 3, kind: input, shape index: {}]
  %s4 = inlined_call_operand.hbm [shape: f32[1,128], index: 4, kind: input, shape index: {}]
  %s5 = inlined_call_operand.hbm [shape: f32[16,128], index: 5, kind: output, shape index: {}]
  %s6 = sld [smem:[#allocation0]]
  $region58: #{_mlp_pallas_call.1} parent=0
    _
  %s8 = ssub.s32 1, %s6
  %s9 = scalar_select 0, %s8, %s6
  $region1: #{_mlp_pallas_call.1} parent=0
    #allocation2 [shape = 'u8[8192]{0}', space=vmem, size = 0x2000, scoped, tag = 'input window, operand 0, single buffered']
    #allocation3 [shape = 's32[1]{0}', space=sflag, size = 0x4, scoped, tag = 'scoped memory for _mlp_pallas_call.1']
    #allocation4 [shape = 's32[1]{0}', space=sflag, size = 0x4, scoped, tag = 'scoped memory for _mlp_pallas_call.1']
    #allocation5 [shape = 'u8[65536]{0}', space=vmem, size = 0x10000, scoped, tag = 'input window, operand 1, single buffered']
    #allocation6 [shape = 's32[1]{0}', space=sflag, size = 0x4, scoped, tag = 'scoped memory for _mlp_pallas_call.1']
    #allocation7 [shape = 'u8[512]{0}', space=vmem, size = 0x400, scoped, tag = 'input window, operand 2, single buffered']
    #allocation8 [shape = 'u8[65536]{0}', space=vmem, size = 0x10000, scoped, tag = 'input window, operand 3, single buffered']
    #allocation9 [shape = 's32[1]{0}', space=sflag, size = 0x4, scoped, tag = 'scoped memory for _mlp_pallas_call.1']
    #allocation10 [shape = 'u8[512]{0}', space=vmem, size = 0x400, scoped, tag = 'input window, operand 4, single buffered']
    #allocation11 [shape = 'u8[8192]{0}', space=vmem, size = 0x2000, scoped, tag = 'output window, operand 0, single buffered']
    %10 = vsyncpa [#allocation3], 0
    %11 = vsyncpa [#allocation6], 0
    %12 = vsyncpa [#allocation9], 0
    %13 = vsyncpa [#allocation4], 0
    // Predicated region
    $region2: #{_mlp_pallas_call.1} parent=1 // pred_check
      _
    $region3: #{_mlp_pallas_call.1} parent=1 // pred_check_branch
      %15 = sbr.rel (0) target = $region5
    $region4: #{_mlp_pallas_call.1} parent=1 // pred_region
      %s17 = ssub.s32 256, 256
      %18 = vsyncadd [#allocation3], %s17
      %s19 = sshll.u32 [#allocation2], 4
      %s20 = int_to_ptr.vmem [resolvable:$true] %s19
      %25 = dma.hbm_to_vmem [thread:$0]  %s0, 256, %s20, [#allocation3], 128, 128, 8
    $region5: #{_mlp_pallas_call.1} parent=1 // pred_fallthru
      _
    // Predicated region
    $region6: #{_mlp_pallas_call.1} parent=1 // pred_check
      _
    $region7: #{_mlp_pallas_call.1} parent=1 // pred_check_branch
      %27 = sbr.rel (0) target = $region9
    $region8: #{_mlp_pallas_call.1} parent=1 // pred_region
      %s29 = ssub.s32 2048, 2048
      %30 = vsyncadd [#allocation6], %s29
      %s31 = sshll.u32 [#allocation5], 4
      %s32 = int_to_ptr.vmem [resolvable:$true] %s31
      %37 = dma.hbm_to_vmem [thread:$0]  %s1, 2048, %s32, [#allocation6], 128, 128, 8
    $region9: #{_mlp_pallas_call.1} parent=1 // pred_fallthru
      _
    // Predicated region
    $region10: #{_mlp_pallas_call.1} parent=1 // pred_check
      _
    $region11: #{_mlp_pallas_call.1} parent=1 // pred_check_branch
      %39 = sbr.rel (0) target = $region13
    $region12: #{_mlp_pallas_call.1} parent=1 // pred_region
      %s41 = ssub.s32 16, 16
      %42 = vsyncadd [#allocation6], %s41
      %s44 = sshll.u32 [#allocation7], 4
      %s45 = int_to_ptr.vmem [resolvable:$true] %s44
      %47 = dma.hbm_to_vmem [thread:$0]  %s2, 16, %s45, [#allocation6]
    $region13: #{_mlp_pallas_call.1} parent=1 // pred_fallthru
      _
    // Predicated region
    $region14: #{_mlp_pallas_call.1} parent=1 // pred_check
      _
    $region15: #{_mlp_pallas_call.1} parent=1 // pred_check_branch
      %49 = sbr.rel (0) target = $region17
    $region16: #{_mlp_pallas_call.1} parent=1 // pred_region
      %s51 = ssub.s32 2048, 2048
      %52 = vsyncadd [#allocation9], %s51
      %s53 = sshll.u32 [#allocation8], 4
      %s54 = int_to_ptr.vmem [resolvable:$true] %s53
      %59 = dma.hbm_to_vmem [thread:$0]  %s3, 2048, %s54, [#allocation9], 128, 128, 8
    $region17: #{_mlp_pallas_call.1} parent=1 // pred_fallthru
      _
    // Predicated region
    $region18: #{_mlp_pallas_call.1} parent=1 // pred_check
      _
    $region19: #{_mlp_pallas_call.1} parent=1 // pred_check_branch
      %61 = sbr.rel (0) target = $region21
    $region20: #{_mlp_pallas_call.1} parent=1 // pred_region
      %s63 = ssub.s32 16, 16
      %64 = vsyncadd [#allocation9], %s63
      %s66 = sshll.u32 [#allocation10], 4
      %s67 = int_to_ptr.vmem [resolvable:$true] %s66
      %69 = dma.hbm_to_vmem [thread:$0]  %s4, 16, %s67, [#allocation9]
    $region21: #{_mlp_pallas_call.1} parent=1 // pred_fallthru
      _
    // Predicated region
    $region22: #{_mlp_pallas_call.1} parent=1 // pred_check
      _
    $region23: #{_mlp_pallas_call.1} parent=1 // pred_check_branch
      %71 = sbr.rel (0) target = $region25
    $region24: #{_mlp_pallas_call.1} parent=1 // pred_region
      %72 = dma.done [#allocation3], 256
    $region25: #{_mlp_pallas_call.1} parent=1 // pred_fallthru
      _
    // Predicated region
    $region26: #{_mlp_pallas_call.1} parent=1 // pred_check
      _
    $region27: #{_mlp_pallas_call.1} parent=1 // pred_check_branch
      %74 = sbr.rel (0) target = $region29
    $region28: #{_mlp_pallas_call.1} parent=1 // pred_region
      %75 = dma.done [#allocation6], 2048
    $region29: #{_mlp_pallas_call.1} parent=1 // pred_fallthru
      _
    // Predicated region
    $region30: #{_mlp_pallas_call.1} parent=1 // pred_check
      _
    $region31: #{_mlp_pallas_call.1} parent=1 // pred_check_branch
      %77 = sbr.rel (0) target = $region33
    $region32: #{_mlp_pallas_call.1} parent=1 // pred_region
      %78 = dma.done [#allocation6], 16
    $region33: #{_mlp_pallas_call.1} parent=1 // pred_fallthru
      _
    // Predicated region
    $region34: #{_mlp_pallas_call.1} parent=1 // pred_check
      _
    $region35: #{_mlp_pallas_call.1} parent=1 // pred_check_branch
      %80 = sbr.rel (0) target = $region37
    $region36: #{_mlp_pallas_call.1} parent=1 // pred_region
      %81 = dma.done [#allocation9], 2048
    $region37: #{_mlp_pallas_call.1} parent=1 // pred_fallthru
      _
    // Predicated region
    $region38: #{_mlp_pallas_call.1} parent=1 // pred_check
      _
    $region39: #{_mlp_pallas_call.1} parent=1 // pred_check_branch
      %83 = sbr.rel (0) target = $region41
    $region40: #{_mlp_pallas_call.1} parent=1 // pred_region
      %84 = dma.done [#allocation9], 16
    $region41: #{_mlp_pallas_call.1} parent=1 // pred_fallthru
      _
    %p85 = scmp.eq.s32.totalorder 0, 0
    // Predicated region
    $region42: #{_mlp_pallas_call.1} parent=1 // pred_check
      %p86 = pneg %p85
    $region43: #{_mlp_pallas_call.1} parent=1 // pred_check_branch
      %88 = sbr.rel (%p86) target = $region45
    $region44: #{_mlp_pallas_call.1} parent=1 // pred_region
      %89 = vst [vmem:[#allocation11] sm:$0xff] 0.0
      %90 = vst [vmem:[#allocation11 + $0x8] sm:$0xff] 0.0
    $region45: #{_mlp_pallas_call.1} parent=1 // pred_fallthru
      _
    %v91 = vld [vmem:[#allocation2] sm:$0xff]
    %v92 = vld [vmem:[#allocation2 + $0x8] sm:$0xff]
    %v93 = vld [vmem:[#allocation5] sm:$0xff]
    %v94 = vld [vmem:[#allocation5 + $0x8] sm:$0xff]
    %v95 = vld [vmem:[#allocation5 + $0x10] sm:$0xff]
    %v96 = vld [vmem:[#allocation5 + $0x18] sm:$0xff]
    %v97 = vld [vmem:[#allocation5 + $0x20] sm:$0xff]
    %v98 = vld [vmem:[#allocation5 + $0x28] sm:$0xff]
    %v99 = vld [vmem:[#allocation5 + $0x30] sm:$0xff]
    %v100 = vld [vmem:[#allocation5 + $0x38] sm:$0xff]
    %v101 = vld [vmem:[#allocation5 + $0x40] sm:$0xff]
    %v102 = vld [vmem:[#allocation5 + $0x48] sm:$0xff]
    %v103 = vld [vmem:[#allocation5 + $0x50] sm:$0xff]
    %v104 = vld [vmem:[#allocation5 + $0x58] sm:$0xff]
    %v105 = vld [vmem:[#allocation5 + $0x60] sm:$0xff]
    %v106 = vld [vmem:[#allocation5 + $0x68] sm:$0xff]
    %v107 = vld [vmem:[#allocation5 + $0x70] sm:$0xff]
    %v108 = vld [vmem:[#allocation5 + $0x78] sm:$0xff]
    %v109 = vld [vmem:[#allocation7] sm:$0x1]
    %v111 = vlaneseq
    %v112 = vshrl.u32 %v111, 7
    %v113 = vsub.s32 0, %v112
    %v114 = vrot.slane %v109, %v113
    %116 = vmatprep.subr.mxu0 0.0
    %117 = vmatpush1.msra.mxu0 %v93
    %118 = vmatprep.subr.mxu0 0.0
    %119 = vmatpush1.msra.mxu0 %v94
    %120 = vmatprep.subr.mxu0 0.0
    %121 = vmatpush1.msra.mxu0 %v95
    %122 = vmatprep.subr.mxu0 0.0
    %123 = vmatpush1.msra.mxu0 %v96
    %124 = vmatprep.subr.mxu0 0.0
    %125 = vmatpush1.msra.mxu0 %v97
    %126 = vmatprep.subr.mxu0 0.0
    %127 = vmatpush1.msra.mxu0 %v98
    %128 = vmatprep.subr.mxu0 0.0
    %129 = vmatpush1.msra.mxu0 %v99
    %130 = vmatprep.subr.mxu0 0.0
    %131 = vmatpush1.msra.mxu0 %v100
    %132 = vmatprep.subr.mxu0 0.0
    %133 = vmatpush1.msra.mxu0 %v101
    %134 = vmatprep.subr.mxu0 0.0
    %135 = vmatpush1.msra.mxu0 %v102
    %136 = vmatprep.subr.mxu0 0.0
    %137 = vmatpush1.msra.mxu0 %v103
    %138 = vmatprep.subr.mxu0 0.0
    %139 = vmatpush1.msra.mxu0 %v104
    %140 = vmatprep.subr.mxu0 0.0
    %141 = vmatpush1.msra.mxu0 %v105
    %142 = vmatprep.subr.mxu0 0.0
    %143 = vmatpush1.msra.mxu0 %v106
    %144 = vmatprep.subr.mxu0 0.0
    %145 = vmatpush1.msra.mxu0 %v107
    %146 = vmatprep.subr.mxu0 0.0
    %147 = vmatpush1.msra.mxu0 %v108
    %148 = vmatprep.subr.mxu0 0.0
    %149 = vmatpush1.msra.mxu0 0.0
    %150 = vmatprep.subr.mxu0 0.0
    %151 = vmatpush1.msra.mxu0 0.0
    %152 = vmatprep.subr.mxu0 0.0
    %153 = vmatpush1.msra.mxu0 0.0
    %154 = vmatprep.subr.mxu0 0.0
    %155 = vmatpush1.msra.mxu0 0.0
    %156 = vmatprep.subr.mxu0 0.0
    %157 = vmatpush1.msra.mxu0 0.0
    %158 = vmatprep.subr.mxu0 0.0
    %159 = vmatpush1.msra.mxu0 0.0
    %160 = vmatprep.subr.mxu0 0.0
    %161 = vmatpush1.msra.mxu0 0.0
    %162 = vmatprep.subr.mxu0 0.0
    %163 = vmatpush1.msra.mxu0 0.0
    %164 = vmatprep.subr.mxu0 0.0
    %165 = vmatpush1.msra.mxu0 0.0
    %166 = vmatprep.subr.mxu0 0.0
    %167 = vmatpush1.msra.mxu0 0.0
    %168 = vmatprep.subr.mxu0 0.0
    %169 = vmatpush1.msra.mxu0 0.0
    %170 = vmatprep.subr.mxu0 0.0
    %171 = vmatpush1.msra.mxu0 0.0
    %172 = vmatprep.subr.mxu0 0.0
    %173 = vmatpush1.msra.mxu0 0.0
    %174 = vmatprep.subr.mxu0 0.0
    %175 = vmatpush1.msra.mxu0 0.0
    %176 = vmatprep.subr.mxu0 0.0
    %177 = vmatpush1.msra.mxu0 0.0
    %178 = vmatprep.subr.mxu0 0.0
    %179 = vmatpush1.msra.mxu0 0.0
    %180 = vmatprep.mubr.f32.mxu0 0.0
    %181 = vmatmul.mubr.f32.gmra.mrb[0].mxu0 %v91
    %v182 = vpop.f32.mrb[0].mxu0
    %v183 = vadd.f32 %v114, %v182
    %v184 = vpop.f32.mrb[0].mxu0
    %185 = vmatprep.mubr.f32.mxu0 0.0
    %186 = vmatmul.mubr.f32.gmra.mrb[0].mxu0 %v92
    %v187 = vpop.f32.mrb[0].mxu0
    %v188 = vadd.f32 %v114, %v187
    %v189 = vpop.f32.mrb[0].mxu0
    %190 = vdwg.mxu0
    %v191 = vmul.f32 %v183, 0.5
    %v192 = vmul.f32 %v188, 0.5
    %v193 = vmul.f32 %v183, 0.70710677
    %v194 = vmul.f32 %v188, 0.70710677
    %v195 = verf.f32.pop %v193
    %v196 = verf.f32.pop %v194
    %v197 = vadd.f32 %v195, 1.0
    %v198 = vadd.f32 %v196, 1.0
    %v199 = vmul.f32 %v191, %v197
    %v200 = vmul.f32 %v192, %v198
    %v201 = vld [vmem:[#allocation11] sm:$0xff]
    %v202 = vld [vmem:[#allocation11 + $0x8] sm:$0xff]
    %v203 = vld [vmem:[#allocation8] sm:$0xff]
    %v204 = vld [vmem:[#allocation8 + $0x8] sm:$0xff]
    %v205 = vld [vmem:[#allocation8 + $0x10] sm:$0xff]
    %v206 = vld [vmem:[#allocation8 + $0x18] sm:$0xff]
    %v207 = vld [vmem:[#allocation8 + $0x20] sm:$0xff]
    %v208 = vld [vmem:[#allocation8 + $0x28] sm:$0xff]
    %v209 = vld [vmem:[#allocation8 + $0x30] sm:$0xff]
    %v210 = vld [vmem:[#allocation8 + $0x38] sm:$0xff]
    %v211 = vld [vmem:[#allocation8 + $0x40] sm:$0xff]
    %v212 = vld [vmem:[#allocation8 + $0x48] sm:$0xff]
    %v213 = vld [vmem:[#allocation8 + $0x50] sm:$0xff]
    %v214 = vld [vmem:[#allocation8 + $0x58] sm:$0xff]
    %v215 = vld [vmem:[#allocation8 + $0x60] sm:$0xff]
    %v216 = vld [vmem:[#allocation8 + $0x68] sm:$0xff]
    %v217 = vld [vmem:[#allocation8 + $0x70] sm:$0xff]
    %v218 = vld [vmem:[#allocation8 + $0x78] sm:$0xff]
    %219 = vmatprep.subr.mxu0 0.0
    %220 = vmatpush1.msra.mxu0 %v203
    %221 = vmatprep.subr.mxu0 0.0
    %222 = vmatpush1.msra.mxu0 %v204
    %223 = vmatprep.subr.mxu0 0.0
    %224 = vmatpush1.msra.mxu0 %v205
    %225 = vmatprep.subr.mxu0 0.0
    %226 = vmatpush1.msra.mxu0 %v206
    %227 = vmatprep.subr.mxu0 0.0
    %228 = vmatpush1.msra.mxu0 %v207
    %229 = vmatprep.subr.mxu0 0.0
    %230 = vmatpush1.msra.mxu0 %v208
    %231 = vmatprep.subr.mxu0 0.0
    %232 = vmatpush1.msra.mxu0 %v209
    %233 = vmatprep.subr.mxu0 0.0
    %234 = vmatpush1.msra.mxu0 %v210
    %235 = vmatprep.subr.mxu0 0.0
    %236 = vmatpush1.msra.mxu0 %v211
    %237 = vmatprep.subr.mxu0 0.0
    %238 = vmatpush1.msra.mxu0 %v212
    %239 = vmatprep.subr.mxu0 0.0
    %240 = vmatpush1.msra.mxu0 %v213
    %241 = vmatprep.subr.mxu0 0.0
    %242 = vmatpush1.msra.mxu0 %v214
    %243 = vmatprep.subr.mxu0 0.0
    %244 = vmatpush1.msra.mxu0 %v215
    %245 = vmatprep.subr.mxu0 0.0
    %246 = vmatpush1.msra.mxu0 %v216
    %247 = vmatprep.subr.mxu0 0.0
    %248 = vmatpush1.msra.mxu0 %v217
    %249 = vmatprep.subr.mxu0 0.0
    %250 = vmatpush1.msra.mxu0 %v218
    %251 = vmatprep.subr.mxu0 0.0
    %252 = vmatpush1.msra.mxu0 0.0
    %253 = vmatprep.subr.mxu0 0.0
    %254 = vmatpush1.msra.mxu0 0.0
    %255 = vmatprep.subr.mxu0 0.0
    %256 = vmatpush1.msra.mxu0 0.0
    %257 = vmatprep.subr.mxu0 0.0
    %258 = vmatpush1.msra.mxu0 0.0
    %259 = vmatprep.subr.mxu0 0.0
    %260 = vmatpush1.msra.mxu0 0.0
    %261 = vmatprep.subr.mxu0 0.0
    %262 = vmatpush1.msra.mxu0 0.0
    %263 = vmatprep.subr.mxu0 0.0
    %264 = vmatpush1.msra.mxu0 0.0
    %265 = vmatprep.subr.mxu0 0.0
    %266 = vmatpush1.msra.mxu0 0.0
    %267 = vmatprep.subr.mxu0 0.0
    %268 = vmatpush1.msra.mxu0 0.0
    %269 = vmatprep.subr.mxu0 0.0
    %270 = vmatpush1.msra.mxu0 0.0
    %271 = vmatprep.subr.mxu0 0.0
    %272 = vmatpush1.msra.mxu0 0.0
    %273 = vmatprep.subr.mxu0 0.0
    %274 = vmatpush1.msra.mxu0 0.0
    %275 = vmatprep.subr.mxu0 0.0
    %276 = vmatpush1.msra.mxu0 0.0
    %277 = vmatprep.subr.mxu0 0.0
    %278 = vmatpush1.msra.mxu0 0.0
    %279 = vmatprep.subr.mxu0 0.0
    %280 = vmatpush1.msra.mxu0 0.0
    %281 = vmatprep.subr.mxu0 0.0
    %282 = vmatpush1.msra.mxu0 0.0
    %283 = vmatprep.mubr.f32.mxu0 0.0
    %284 = vmatmul.mubr.f32.gmra.mrb[0].mxu0 %v199
    %v285 = vpop.f32.mrb[0].mxu0
    %v286 = vadd.f32 0.0, %v285
    %v287 = vpop.f32.mrb[0].mxu0
    %288 = vmatprep.mubr.f32.mxu0 0.0
    %289 = vmatmul.mubr.f32.gmra.mrb[0].mxu0 %v200
    %v290 = vpop.f32.mrb[0].mxu0
    %v291 = vadd.f32 0.0, %v290
    %v292 = vpop.f32.mrb[0].mxu0
    %293 = vdwg.mxu0
    %v294 = vadd.f32 %v201, %v286
    %v295 = vadd.f32 %v202, %v291
    %296 = vst [vmem:[#allocation11] sm:$0xff] %v294
    %297 = vst [vmem:[#allocation11 + $0x8] sm:$0xff] %v295
    // Predicated region
    $region46: #{_mlp_pallas_call.1} parent=1 // pred_check
      %p298 = pneg %p85
    $region47: #{_mlp_pallas_call.1} parent=1 // pred_check_branch
      %300 = sbr.rel (%p298) target = $region49
    $region48: #{_mlp_pallas_call.1} parent=1 // pred_region
      %v301 = vld [vmem:[#allocation11] sm:$0xff]
      %v302 = vld [vmem:[#allocation11 + $0x8] sm:$0xff]
      %v303 = vld [vmem:[#allocation10] sm:$0x1]
      %v305 = vlaneseq
      %v306 = vshrl.u32 %v305, 7
      %v307 = vsub.s32 0, %v306
      %v308 = vrot.slane %v303, %v307
      %v310 = vadd.f32 %v301, %v308
      %v311 = vadd.f32 %v302, %v308
      %312 = vst [vmem:[#allocation11] sm:$0xff] %v310
      %313 = vst [vmem:[#allocation11 + $0x8] sm:$0xff] %v311
    $region49: #{_mlp_pallas_call.1} parent=1 // pred_fallthru
      _
    // Predicated region
    $region50: #{_mlp_pallas_call.1} parent=1 // pred_check
      _
    $region51: #{_mlp_pallas_call.1} parent=1 // pred_check_branch
      %315 = sbr.rel (0) target = $region53
    $region52: #{_mlp_pallas_call.1} parent=1 // pred_region
      %s317 = ssub.s32 256, 256
      %318 = vsyncadd [#allocation4], %s317
      %s319 = sshll.u32 [#allocation11], 4
      %s320 = int_to_ptr.vmem [resolvable:$true] %s319
      %325 = dma.vmem_to_hbm [thread:$0]  %s320, 256, %s5, [#allocation4], 128, 128, 8
    $region53: #{_mlp_pallas_call.1} parent=1 // pred_fallthru
      _
    // Predicated region
    $region54: #{_mlp_pallas_call.1} parent=1 // pred_check
      _
    $region55: #{_mlp_pallas_call.1} parent=1 // pred_check_branch
      %327 = sbr.rel (0) target = $region57
    $region56: #{_mlp_pallas_call.1} parent=1 // pred_region
      %328 = dma.done [#allocation4], 256
    $region57: #{_mlp_pallas_call.1} parent=1 // pred_fallthru
      _
    %329 = vsyncpa [#allocation3], 1
    %330 = vsyncpa [#allocation6], 1
    %331 = vsyncpa [#allocation9], 1
    %332 = vsyncpa [#allocation4], 1

</llo_original>
